<compile_context>
chip_gen: v6e
topology: v6e:2x2x1
jax: 0.10.0
libtpu: 0.0.40
codegen_flags: <defaults>
</compile_context>

<pallas_src>
import jax
import jax.numpy as jnp
from jax.experimental import pallas as pl
from jax.experimental.pallas import tpu as pltpu


HIDDEN = 256
LANE = 128
SUBLANE = 8


def _round_up(x, m):
    return (x + m - 1) // m * m


def _cdiv(a, b):
    return -(-a // b)


def actor_kernel(x_ref,
                 w1_ref, b1_ref,
                 w2_ref, b2_ref,
                 w3_ref, b3_ref,
                 w4_ref, b4_ref,
                 o_ref):
    """Whole MLP forward for one batch tile. bf16 weights/activations feed the
    MXU; accumulation is f32 (preferred_element_type); tanh stays in f32."""
    x = x_ref[...]  # already bf16 (cast in the wrapper)

    h = jnp.dot(x, w1_ref[...], preferred_element_type=jnp.float32) + b1_ref[...]
    h = jnp.maximum(h, 0.0).astype(jnp.bfloat16)

    h = jnp.dot(h, w2_ref[...], preferred_element_type=jnp.float32) + b2_ref[...]
    h = jnp.maximum(h, 0.0).astype(jnp.bfloat16)

    h = jnp.dot(h, w3_ref[...], preferred_element_type=jnp.float32) + b3_ref[...]
    h = jnp.maximum(h, 0.0).astype(jnp.bfloat16)

    y = jnp.dot(h, w4_ref[...], preferred_element_type=jnp.float32) + b4_ref[...]
    o_ref[...] = jnp.tanh(y).astype(o_ref.dtype)


def actor_forward(state, params, *, batch_tile=None, out_dtype=jnp.float32,
                  core_parallel=False):
    """Run the Actor forward pass with a Pallas kernel.

    state:  [B, state_dim] float32
    params: dict with w1..w4 ([in, out]) and b1..b4 ([1, out]), float32
    batch_tile: target rows per grid step (default 512).
    out_dtype:  jnp.float32 (default) or jnp.bfloat16 (halves writeback bytes).
    core_parallel: use pltpu.CORE_PARALLEL on the batch axis (v7x dual-TC).
    """
    B, S = state.shape
    A = params["w4"].shape[1]
    A_pad = _round_up(A, LANE)          # lane-dense output (unmasked stores)

    # --- batch tiling: near-equal, sublane-aligned tiles -------------------
    # Split B into ceil(B/target) tiles of equal size tb (rounded to the 8-row
    # sublane). This minimizes padding on ragged batches (<8 pad rows/tile)
    # instead of padding B up to a multiple of a fixed tile.
    target = 512 if batch_tile is None else batch_tile
    target = max(SUBLANE, _round_up(target, SUBLANE))
    n_tiles = _cdiv(B, target)
    tb = _round_up(_cdiv(B, n_tiles), SUBLANE)
    B_pad = n_tiles * tb

    # bf16 activations in, bf16 weights (half the HBM<->VMEM traffic, native
    # MXU rate); f32 biases added to the f32 accumulator. Layer-4 columns are
    # zero-padded to 128 lanes for a lane-dense writeback.
    x = state.astype(jnp.bfloat16)
    if B_pad != B:
        x = jnp.pad(x, ((0, B_pad - B), (0, 0)))

    w1 = params["w1"].astype(jnp.bfloat16)
    w2 = params["w2"].astype(jnp.bfloat16)
    w3 = params["w3"].astype(jnp.bfloat16)
    w4 = jnp.pad(params["w4"], ((0, 0), (0, A_pad - A))).astype(jnp.bfloat16)
    b1 = params["b1"].astype(jnp.float32)
    b2 = params["b2"].astype(jnp.float32)
    b3 = params["b3"].astype(jnp.float32)
    b4 = jnp.pad(params["b4"], ((0, 0), (0, A_pad - A))).astype(jnp.float32)

    grid = (n_tiles,)

    # Invariant weights/biases: constant block index -> single-buffered
    # (no useless double-buffer of ~400 KB of resident weights).
    def _const_spec(shape):
        return pl.BlockSpec(shape, lambda i: (0, 0),
                            pipeline_mode=pl.Buffered(1))

    in_specs = [
        pl.BlockSpec((tb, S), lambda i: (i, 0)),      # state tile (bf16)
        _const_spec((S, HIDDEN)),                     # w1
        _const_spec((1, HIDDEN)),                     # b1
        _const_spec((HIDDEN, HIDDEN)),                # w2
        _const_spec((1, HIDDEN)),                     # b2
        _const_spec((HIDDEN, HIDDEN)),                # w3
        _const_spec((1, HIDDEN)),                     # b3
        _const_spec((HIDDEN, A_pad)),                 # w4 (padded)
        _const_spec((1, A_pad)),                      # b4 (padded)
    ]
    out_specs = pl.BlockSpec((tb, A_pad), lambda i: (i, 0))

    out_itemsize = jnp.dtype(out_dtype).itemsize
    flops = 2 * B_pad * (S * HIDDEN + 2 * HIDDEN * HIDDEN + HIDDEN * A_pad)
    weight_bytes = 2 * (S * HIDDEN + 2 * HIDDEN * HIDDEN + HIDDEN * A_pad)
    bias_bytes = 4 * (3 * HIDDEN + A_pad)
    act_bytes = 2 * B_pad * S + out_itemsize * B_pad * A_pad
    cost = pl.CostEstimate(
        flops=flops,
        transcendentals=B_pad * A_pad,               # tanh
        bytes_accessed=weight_bytes + bias_bytes + act_bytes,
    )

    batch_sem = pltpu.CORE_PARALLEL if core_parallel else "parallel"

    out = pl.pallas_call(
        actor_kernel,
        out_shape=jax.ShapeDtypeStruct((B_pad, A_pad), out_dtype),
        grid_spec=pltpu.PrefetchScalarGridSpec(
            num_scalar_prefetch=0,
            grid=grid,
            in_specs=in_specs,
            out_specs=out_specs,
        ),
        compiler_params=pltpu.CompilerParams(
            dimension_semantics=(batch_sem,),
            vmem_limit_bytes=32 * 1024 * 1024,
        ),
        cost_estimate=cost,
    )(x, w1, b1, w2, b2, w3, b3, w4, b4)

    return out[:B, :A]


def init_actor_params(key, state_dim, action_dim):
    """Deterministic init mimicking PyTorch's nn.Linear default
    (uniform in [-1/sqrt(fan_in), 1/sqrt(fan_in)])."""
    dims = [(state_dim, HIDDEN), (HIDDEN, HIDDEN), (HIDDEN, HIDDEN),
            (HIDDEN, action_dim)]
    params = {}
    for idx, (fan_in, fan_out) in enumerate(dims, start=1):
        key, kw, kb = jax.random.split(key, 3)
        bound = 1.0 / jnp.sqrt(jnp.float32(fan_in))
        params[f"w{idx}"] = jax.random.uniform(
            kw, (fan_in, fan_out), jnp.float32, minval=-bound, maxval=bound)
        params[f"b{idx}"] = jax.random.uniform(
            kb, (1, fan_out), jnp.float32, minval=-bound, maxval=bound)
    return params


def actor_reference(state, params):
    """Plain-JAX f32 reference of the same forward pass."""
    h = jnp.maximum(state @ params["w1"] + params["b1"], 0.0)
    h = jnp.maximum(h @ params["w2"] + params["b2"], 0.0)
    h = jnp.maximum(h @ params["w3"] + params["b3"], 0.0)
    return jnp.tanh(h @ params["w4"] + params["b4"])


if __name__ == "__main__":
    key = jax.random.PRNGKey(0)
    key, kp, kx, kx2 = jax.random.split(key, 4)

    batch = 8
    state_dim = 32
    action_dim = 8

    params = init_actor_params(kp, state_dim, action_dim)
    state = jax.random.normal(kx, (batch, state_dim), jnp.float32)

    out = actor_forward(state, params)
    out = jax.block_until_ready(out)
    ref = actor_reference(state, params)
    assert out.shape == (batch, action_dim)
    # bf16 weights/activations with f32 accumulation -> relaxed tolerance.
    assert jnp.allclose(out, ref, atol=3e-2, rtol=3e-2)

    # Ragged, multi-tile batch: near-equal tiling gives 3 tiles of 104 rows
    # (12 pad rows total instead of 84 with a fixed 128-row tile).
    batch2 = 300
    state2 = jax.random.normal(kx2, (batch2, state_dim), jnp.float32)
    out2 = jax.block_until_ready(actor_forward(state2, params, batch_tile=128))
    ref2 = actor_reference(state2, params)
    assert out2.shape == (batch2, action_dim)
    assert jnp.allclose(out2, ref2, atol=3e-2, rtol=3e-2)

    print("KERNEL_OK")
</pallas_src>

<mosaic_0001>
module attributes {stable_mosaic.version = 11 : i64} {
  func.func @actor_kernel(%arg0: i32, %arg1: memref<8x32xbf16, #tpu.memory_space<vmem>>, %arg2: memref<32x256xbf16, #tpu.memory_space<vmem>>, %arg3: memref<1x256xf32, #tpu.memory_space<vmem>>, %arg4: memref<256x256xbf16, #tpu.memory_space<vmem>>, %arg5: memref<1x256xf32, #tpu.memory_space<vmem>>, %arg6: memref<256x256xbf16, #tpu.memory_space<vmem>>, %arg7: memref<1x256xf32, #tpu.memory_space<vmem>>, %arg8: memref<256x128xbf16, #tpu.memory_space<vmem>>, %arg9: memref<1x128xf32, #tpu.memory_space<vmem>>, %arg10: memref<8x128xf32, #tpu.memory_space<vmem>>) attributes {dimension_semantics = [#tpu.dimension_semantics<parallel>], iteration_bounds = array<i64: 1>, scalar_prefetch = 0 : i64, scratch_operands = 0 : i64, tpu.core_type = #tpu.core_type<tc>, window_params = [{transform_indices = @transform_0, window_bounds = array<i64: 8, 32>}, {pipeline_mode = #tpu.pipeline_mode<synchronous>, transform_indices = @transform_1, window_bounds = array<i64: 32, 256>}, {pipeline_mode = #tpu.pipeline_mode<synchronous>, transform_indices = @transform_2, window_bounds = array<i64: 1, 256>}, {pipeline_mode = #tpu.pipeline_mode<synchronous>, transform_indices = @transform_3, window_bounds = array<i64: 256, 256>}, {pipeline_mode = #tpu.pipeline_mode<synchronous>, transform_indices = @transform_4, window_bounds = array<i64: 1, 256>}, {pipeline_mode = #tpu.pipeline_mode<synchronous>, transform_indices = @transform_5, window_bounds = array<i64: 256, 256>}, {pipeline_mode = #tpu.pipeline_mode<synchronous>, transform_indices = @transform_6, window_bounds = array<i64: 1, 256>}, {pipeline_mode = #tpu.pipeline_mode<synchronous>, transform_indices = @transform_7, window_bounds = array<i64: 256, 128>}, {pipeline_mode = #tpu.pipeline_mode<synchronous>, transform_indices = @transform_8, window_bounds = array<i64: 1, 128>}, {transform_indices = @transform_9, window_bounds = array<i64: 8, 128>}]} {
    %c0 = arith.constant 0 : index
    %c0_0 = arith.constant 0 : index
    %0 = vector.load %arg1[%c0, %c0_0] : memref<8x32xbf16, #tpu.memory_space<vmem>>, vector<8x32xbf16>
    %c0_1 = arith.constant 0 : index
    %c0_2 = arith.constant 0 : index
    %1 = vector.load %arg2[%c0_1, %c0_2] : memref<32x256xbf16, #tpu.memory_space<vmem>>, vector<32x256xbf16>
    %cst = arith.constant dense<0.000000e+00> : vector<8x256xf32>
    %2 = tpu.matmul %0, %1, %cst {dimension_numbers = #tpu.dot_dimension_numbers<[1], [0], [0], [1], [0, 0, 1, 1], [], []>} : vector<8x32xbf16>, vector<32x256xbf16>, vector<8x256xf32> -> vector<8x256xf32>
    %c0_3 = arith.constant 0 : index
    %c0_4 = arith.constant 0 : index
    %3 = vector.load %arg3[%c0_3, %c0_4] : memref<1x256xf32, #tpu.memory_space<vmem>>, vector<1x256xf32>
    %4 = vector.broadcast %3 : vector<1x256xf32> to vector<8x256xf32>
    %5 = arith.addf %2, %4 : vector<8x256xf32>
    %cst_5 = arith.constant 0.000000e+00 : f32
    %6 = vector.broadcast %cst_5 : f32 to vector<8x256xf32>
    %7 = arith.maximumf %5, %6 : vector<8x256xf32>
    %8 = arith.truncf %7 : vector<8x256xf32> to vector<8x256xbf16>
    %c0_6 = arith.constant 0 : index
    %c0_7 = arith.constant 0 : index
    %9 = vector.load %arg4[%c0_6, %c0_7] : memref<256x256xbf16, #tpu.memory_space<vmem>>, vector<256x256xbf16>
    %cst_8 = arith.constant dense<0.000000e+00> : vector<8x256xf32>
    %10 = tpu.matmul %8, %9, %cst_8 {dimension_numbers = #tpu.dot_dimension_numbers<[1], [0], [0], [1], [0, 0, 1, 1], [], []>} : vector<8x256xbf16>, vector<256x256xbf16>, vector<8x256xf32> -> vector<8x256xf32>
    %c0_9 = arith.constant 0 : index
    %c0_10 = arith.constant 0 : index
    %11 = vector.load %arg5[%c0_9, %c0_10] : memref<1x256xf32, #tpu.memory_space<vmem>>, vector<1x256xf32>
    %12 = vector.broadcast %11 : vector<1x256xf32> to vector<8x256xf32>
    %13 = arith.addf %10, %12 : vector<8x256xf32>
    %cst_11 = arith.constant 0.000000e+00 : f32
    %14 = vector.broadcast %cst_11 : f32 to vector<8x256xf32>
    %15 = arith.maximumf %13, %14 : vector<8x256xf32>
    %16 = arith.truncf %15 : vector<8x256xf32> to vector<8x256xbf16>
    %c0_12 = arith.constant 0 : index
    %c0_13 = arith.constant 0 : index
    %17 = vector.load %arg6[%c0_12, %c0_13] : memref<256x256xbf16, #tpu.memory_space<vmem>>, vector<256x256xbf16>
    %cst_14 = arith.constant dense<0.000000e+00> : vector<8x256xf32>
    %18 = tpu.matmul %16, %17, %cst_14 {dimension_numbers = #tpu.dot_dimension_numbers<[1], [0], [0], [1], [0, 0, 1, 1], [], []>} : vector<8x256xbf16>, vector<256x256xbf16>, vector<8x256xf32> -> vector<8x256xf32>
    %c0_15 = arith.constant 0 : index
    %c0_16 = arith.constant 0 : index
    %19 = vector.load %arg7[%c0_15, %c0_16] : memref<1x256xf32, #tpu.memory_space<vmem>>, vector<1x256xf32>
    %20 = vector.broadcast %19 : vector<1x256xf32> to vector<8x256xf32>
    %21 = arith.addf %18, %20 : vector<8x256xf32>
    %cst_17 = arith.constant 0.000000e+00 : f32
    %22 = vector.broadcast %cst_17 : f32 to vector<8x256xf32>
    %23 = arith.maximumf %21, %22 : vector<8x256xf32>
    %24 = arith.truncf %23 : vector<8x256xf32> to vector<8x256xbf16>
    %c0_18 = arith.constant 0 : index
    %c0_19 = arith.constant 0 : index
    %25 = vector.load %arg8[%c0_18, %c0_19] : memref<256x128xbf16, #tpu.memory_space<vmem>>, vector<256x128xbf16>
    %cst_20 = arith.constant dense<0.000000e+00> : vector<8x128xf32>
    %26 = tpu.matmul %24, %25, %cst_20 {dimension_numbers = #tpu.dot_dimension_numbers<[1], [0], [0], [1], [0, 0, 1, 1], [], []>} : vector<8x256xbf16>, vector<256x128xbf16>, vector<8x128xf32> -> vector<8x128xf32>
    %c0_21 = arith.constant 0 : index
    %c0_22 = arith.constant 0 : index
    %27 = vector.load %arg9[%c0_21, %c0_22] : memref<1x128xf32, #tpu.memory_space<vmem>>, vector<1x128xf32>
    %28 = vector.broadcast %27 : vector<1x128xf32> to vector<8x128xf32>
    %29 = arith.addf %26, %28 : vector<8x128xf32>
    %30 = math.tanh %29 : vector<8x128xf32>
    %c0_23 = arith.constant 0 : index
    %c0_24 = arith.constant 0 : index
    %31 = vector.load %arg10[%c0_23, %c0_24] : memref<8x128xf32, #tpu.memory_space<vmem>>, vector<8x128xf32>
    tpu.vector_store %arg10[%c0_23, %c0_24], %30 {strides = array<i32>} : memref<8x128xf32, #tpu.memory_space<vmem>>, vector<8x128xf32>,
    return
  }
  func.func @transform_0(%arg0: i32) -> (i32, i32) {
    %c0_i32 = arith.constant 0 : i32
    %c0_i32_0 = arith.constant 0 : i32
    return %arg0, %c0_i32 : i32, i32
  }
  func.func @transform_1(%arg0: i32) -> (i32, i32) {
    %c0_i32 = arith.constant 0 : i32
    %c0_i32_0 = arith.constant 0 : i32
    %c0_i32_1 = arith.constant 0 : i32
    return %c0_i32, %c0_i32_0 : i32, i32
  }
  func.func @transform_2(%arg0: i32) -> (i32, i32) {
    %c0_i32 = arith.constant 0 : i32
    %c0_i32_0 = arith.constant 0 : i32
    %c0_i32_1 = arith.constant 0 : i32
    return %c0_i32, %c0_i32_0 : i32, i32
  }
  func.func @transform_3(%arg0: i32) -> (i32, i32) {
    %c0_i32 = arith.constant 0 : i32
    %c0_i32_0 = arith.constant 0 : i32
    %c0_i32_1 = arith.constant 0 : i32
    return %c0_i32, %c0_i32_0 : i32, i32
  }
  func.func @transform_4(%arg0: i32) -> (i32, i32) {
    %c0_i32 = arith.constant 0 : i32
    %c0_i32_0 = arith.constant 0 : i32
    %c0_i32_1 = arith.constant 0 : i32
    return %c0_i32, %c0_i32_0 : i32, i32
  }
  func.func @transform_5(%arg0: i32) -> (i32, i32) {
    %c0_i32 = arith.constant 0 : i32
    %c0_i32_0 = arith.constant 0 : i32
    %c0_i32_1 = arith.constant 0 : i32
    return %c0_i32, %c0_i32_0 : i32, i32
  }
  func.func @transform_6(%arg0: i32) -> (i32, i32) {
    %c0_i32 = arith.constant 0 : i32
    %c0_i32_0 = arith.constant 0 : i32
    %c0_i32_1 = arith.constant 0 : i32
    return %c0_i32, %c0_i32_0 : i32, i32
  }
  func.func @transform_7(%arg0: i32) -> (i32, i32) {
    %c0_i32 = arith.constant 0 : i32
    %c0_i32_0 = arith.constant 0 : i32
    %c0_i32_1 = arith.constant 0 : i32
    return %c0_i32, %c0_i32_0 : i32, i32
  }
  func.func @transform_8(%arg0: i32) -> (i32, i32) {
    %c0_i32 = arith.constant 0 : i32
    %c0_i32_0 = arith.constant 0 : i32
    %c0_i32_1 = arith.constant 0 : i32
    return %c0_i32, %c0_i32_0 : i32, i32
  }
  func.func @transform_9(%arg0: i32) -> (i32, i32) {
    %c0_i32 = arith.constant 0 : i32
    %c0_i32_0 = arith.constant 0 : i32
    return %arg0, %c0_i32 : i32, i32
  }
}

</mosaic_0001>

<llo_original>
// kernel: tpu_custom_call.1
$region0: #{tpu_custom_call.1}
  #allocation0 [shape = 'u32[]', space=smem, size = 0x4, offset = 0x4, fixed_abs, tag = 'smem constant byte address 0x4 - core index']
  #allocation1 [shape = 'u32[144,128]{1,0:T(1,128)}', space=vmem, size = 0x12000, scoped, tag = 'internal scratch']
  %s0 = inlined_call_operand.hbm [shape: bf16[8,32], index: 0, kind: input, shape index: {}]
  %s1 = inlined_call_operand.hbm [shape: bf16[32,256], index: 1, kind: input, shape index: {}]
  %s2 = inlined_call_operand.vmem [shape: f32[1,256], index: 2, kind: input, shape index: {}]
  %s3 = inlined_call_operand.hbm [shape: bf16[256,256], index: 3, kind: input, shape index: {}]
  %s4 = inlined_call_operand.vmem [shape: f32[1,256], index: 4, kind: input, shape index: {}]
  %s5 = inlined_call_operand.hbm [shape: bf16[256,256], index: 5, kind: input, shape index: {}]
  %s6 = inlined_call_operand.vmem [shape: f32[1,256], index: 6, kind: input, shape index: {}]
  %s7 = inlined_call_operand.hbm [shape: bf16[256,128], index: 7, kind: input, shape index: {}]
  %s8 = inlined_call_operand.vmem [shape: f32[1,128], index: 8, kind: input, shape index: {}]
  %s9 = inlined_call_operand.hbm [shape: f32[8,128], index: 9, kind: output, shape index: {}]
  %s10 = sld [smem:[#allocation0]]
  $region66: #{tpu_custom_call.1} parent=0
    _
  %s12 = ssub.s32 1, %s10
  %s13 = scalar_select 0, %s12, %s10
  $region1: #{tpu_custom_call.1} parent=0
    #allocation2 [shape = 'u8[2048]{0}', space=vmem, size = 0x800, scoped, tag = 'input window, operand 0, single buffered']
    #allocation3 [shape = 's32[1]{0}', space=sflag, size = 0x4, scoped, tag = 'scoped memory for tpu_custom_call.1']
    #allocation4 [shape = 's32[1]{0}', space=sflag, size = 0x4, scoped, tag = 'scoped memory for tpu_custom_call.1']
    #allocation5 [shape = 'u8[16384]{0}', space=vmem, size = 0x4000, scoped, tag = 'input window, operand 1, single buffered']
    #allocation6 [shape = 's32[1]{0}', space=sflag, size = 0x4, scoped, tag = 'scoped memory for tpu_custom_call.1']
    #allocation7 [shape = 'u8[131072]{0}', space=vmem, size = 0x20000, scoped, tag = 'input window, operand 3, single buffered']
    #allocation8 [shape = 'u8[131072]{0}', space=vmem, size = 0x20000, scoped, tag = 'input window, operand 5, single buffered']
    #allocation9 [shape = 's32[1]{0}', space=sflag, size = 0x4, scoped, tag = 'scoped memory for tpu_custom_call.1']
    #allocation10 [shape = 'u8[65536]{0}', space=vmem, size = 0x10000, scoped, tag = 'input window, operand 7, single buffered']
    #allocation11 [shape = 'u8[4096]{0}', space=vmem, size = 0x1000, scoped, tag = 'output window, operand 0, single buffered']
    %14 = vsyncpa [#allocation3], 0
    %15 = vsyncpa [#allocation6], 0
    %16 = vsyncpa [#allocation9], 0
    %17 = vsyncpa [#allocation4], 0
    // Predicated region
    $region2: #{tpu_custom_call.1} parent=1 // pred_check
      _
    $region3: #{tpu_custom_call.1} parent=1 // pred_check_branch
      %19 = sbr.rel (0) target = $region5
    $region4: #{tpu_custom_call.1} parent=1 // pred_region
      %s21 = ssub.s32 64, 64
      %22 = vsyncadd [#allocation3], %s21
      %s24 = sshll.u32 [#allocation2], 4
      %s25 = int_to_ptr.vmem [resolvable:$true] %s24
      %27 = dma.hbm_to_vmem [thread:$0]  %s0, 64, %s25, [#allocation3]
    $region5: #{tpu_custom_call.1} parent=1 // pred_fallthru
      _
    // Predicated region
    $region6: #{tpu_custom_call.1} parent=1 // pred_check
      _
    $region7: #{tpu_custom_call.1} parent=1 // pred_check_branch
      %29 = sbr.rel (0) target = $region9
    $region8: #{tpu_custom_call.1} parent=1 // pred_region
      %s31 = ssub.s32 512, 512
      %32 = vsyncadd [#allocation6], %s31
      %s33 = sshll.u32 [#allocation5], 4
      %s34 = int_to_ptr.vmem [resolvable:$true] %s33
      %39 = dma.hbm_to_vmem [thread:$0]  %s1, 512, %s34, [#allocation6], 128, 128, 8
    $region9: #{tpu_custom_call.1} parent=1 // pred_fallthru
      _
    // Predicated region
    $region10: #{tpu_custom_call.1} parent=1 // pred_check
      _
    $region11: #{tpu_custom_call.1} parent=1 // pred_check_branch
      %41 = sbr.rel (0) target = $region13
    $region12: #{tpu_custom_call.1} parent=1 // pred_region
      _
    $region13: #{tpu_custom_call.1} parent=1 // pred_fallthru
      _
    // Predicated region
    $region14: #{tpu_custom_call.1} parent=1 // pred_check
      _
    $region15: #{tpu_custom_call.1} parent=1 // pred_check_branch
      %43 = sbr.rel (0) target = $region17
    $region16: #{tpu_custom_call.1} parent=1 // pred_region
      %s45 = ssub.s32 4096, 4096
      %46 = vsyncadd [#allocation6], %s45
      %s47 = sshll.u32 [#allocation7], 4
      %s48 = int_to_ptr.vmem [resolvable:$true] %s47
      %53 = dma.hbm_to_vmem [thread:$0]  %s3, 4096, %s48, [#allocation6], 128, 128, 8
    $region17: #{tpu_custom_call.1} parent=1 // pred_fallthru
      _
    // Predicated region
    $region18: #{tpu_custom_call.1} parent=1 // pred_check
      _
    $region19: #{tpu_custom_call.1} parent=1 // pred_check_branch
      %55 = sbr.rel (0) target = $region21
    $region20: #{tpu_custom_call.1} parent=1 // pred_region
      _
    $region21: #{tpu_custom_call.1} parent=1 // pred_fallthru
      _
    // Predicated region
    $region22: #{tpu_custom_call.1} parent=1 // pred_check
      _
    $region23: #{tpu_custom_call.1} parent=1 // pred_check_branch
      %57 = sbr.rel (0) target = $region25
    $region24: #{tpu_custom_call.1} parent=1 // pred_region
      %s59 = ssub.s32 4096, 4096
      %60 = vsyncadd [#allocation9], %s59
      %s61 = sshll.u32 [#allocation8], 4
      %s62 = int_to_ptr.vmem [resolvable:$true] %s61
      %67 = dma.hbm_to_vmem [thread:$0]  %s5, 4096, %s62, [#allocation9], 128, 128, 8
    $region25: #{tpu_custom_call.1} parent=1 // pred_fallthru
      _
    // Predicated region
    $region26: #{tpu_custom_call.1} parent=1 // pred_check
      _
    $region27: #{tpu_custom_call.1} parent=1 // pred_check_branch
      %69 = sbr.rel (0) target = $region29
    $region28: #{tpu_custom_call.1} parent=1 // pred_region
      _
    $region29: #{tpu_custom_call.1} parent=1 // pred_fallthru
      _
    // Predicated region
    $region30: #{tpu_custom_call.1} parent=1 // pred_check
      _
    $region31: #{tpu_custom_call.1} parent=1 // pred_check_branch
      %71 = sbr.rel (0) target = $region33
    $region32: #{tpu_custom_call.1} parent=1 // pred_region
      %s73 = ssub.s32 2048, 2048
      %74 = vsyncadd [#allocation9], %s73
      %s75 = sshll.u32 [#allocation10], 4
      %s76 = int_to_ptr.vmem [resolvable:$true] %s75
      %81 = dma.hbm_to_vmem [thread:$0]  %s7, 2048, %s76, [#allocation9], 64, 64, 4
    $region33: #{tpu_custom_call.1} parent=1 // pred_fallthru
      _
    // Predicated region
    $region34: #{tpu_custom_call.1} parent=1 // pred_check
      _
    $region35: #{tpu_custom_call.1} parent=1 // pred_check_branch
      %83 = sbr.rel (0) target = $region37
    $region36: #{tpu_custom_call.1} parent=1 // pred_region
      _
    $region37: #{tpu_custom_call.1} parent=1 // pred_fallthru
      _
    // Predicated region
    $region38: #{tpu_custom_call.1} parent=1 // pred_check
      _
    $region39: #{tpu_custom_call.1} parent=1 // pred_check_branch
      %85 = sbr.rel (0) target = $region41
    $region40: #{tpu_custom_call.1} parent=1 // pred_region
      %86 = dma.done [#allocation3], 64
    $region41: #{tpu_custom_call.1} parent=1 // pred_fallthru
      _
    // Predicated region
    $region42: #{tpu_custom_call.1} parent=1 // pred_check
      _
    $region43: #{tpu_custom_call.1} parent=1 // pred_check_branch
      %88 = sbr.rel (0) target = $region45
    $region44: #{tpu_custom_call.1} parent=1 // pred_region
      %89 = dma.done [#allocation6], 512
    $region45: #{tpu_custom_call.1} parent=1 // pred_fallthru
      _
    // Predicated region
    $region46: #{tpu_custom_call.1} parent=1 // pred_check
      _
    $region47: #{tpu_custom_call.1} parent=1 // pred_check_branch
      %91 = sbr.rel (0) target = $region49
    $region48: #{tpu_custom_call.1} parent=1 // pred_region
      %92 = dma.done [#allocation6], 4096
    $region49: #{tpu_custom_call.1} parent=1 // pred_fallthru
      _
    // Predicated region
    $region50: #{tpu_custom_call.1} parent=1 // pred_check
      _
    $region51: #{tpu_custom_call.1} parent=1 // pred_check_branch
      %94 = sbr.rel (0) target = $region53
    $region52: #{tpu_custom_call.1} parent=1 // pred_region
      %95 = dma.done [#allocation9], 4096
    $region53: #{tpu_custom_call.1} parent=1 // pred_fallthru
      _
    // Predicated region
    $region54: #{tpu_custom_call.1} parent=1 // pred_check
      _
    $region55: #{tpu_custom_call.1} parent=1 // pred_check_branch
      %97 = sbr.rel (0) target = $region57
    $region56: #{tpu_custom_call.1} parent=1 // pred_region
      %98 = dma.done [#allocation9], 2048
    $region57: #{tpu_custom_call.1} parent=1 // pred_fallthru
      _
    %v100 = vld [vmem:[#allocation2] sm:$0xf]
    %v101 = vld [vmem:[#allocation5] sm:$0xff]
    %v102 = vld [vmem:[#allocation5 + $0x8] sm:$0xff]
    %v103 = vld [vmem:[#allocation5 + $0x10] sm:$0xff]
    %v104 = vld [vmem:[#allocation5 + $0x18] sm:$0xff]
    %v105 = vld [vmem:[%s2] sm:$0x3]
    %v107 = vlaneseq
    %v108 = vshrl.u32 %v107, 7
    %v109 = vsub.s32 0, %v108
    %v110 = vrot.slane %v105, %v109
    %v111 = vlaneseq
    %v112 = vshrl.u32 %v111, 7
    %v113 = vsub.s32 1, %v112
    %v114 = vrot.slane %v105, %v113
    %v121 = vunpack.c.l.b16 %v101
    %v122 = vunpack.c.h.b16 %v101
    %v123 = vunpack.c.l.b16 %v102
    %v124 = vunpack.c.h.b16 %v102
    %v125 = vunpack.c.l.b16 %v103
    %v126 = vunpack.c.h.b16 %v103
    %v127 = vunpack.c.l.b16 %v104
    %v128 = vunpack.c.h.b16 %v104
    %v129 = vpack.c.b16 %v123, %v121
    %v130 = vpack.c.b16 %v124, %v122
    %v131 = vpack.c.b16 %v127, %v125
    %v132 = vpack.c.b16 %v128, %v126
    %vm137 = vcmask 261120
    %v139 = vsel %vm137, %v100, 0
    %141 = vmatprep.subr.bf16.mxu0 0
    %142 = vmatpush1.bf16.msra.mxu0 0
    %143 = vmatprep.subr.bf16.mxu0 0
    %144 = vmatpush1.bf16.msra.mxu0 0
    %145 = vmatprep.subr.bf16.mxu0 0
    %146 = vmatpush1.bf16.msra.mxu0 0
    %147 = vmatprep.subr.bf16.mxu0 0
    %148 = vmatpush1.bf16.msra.mxu0 0
    %149 = vmatprep.subr.bf16.mxu0 0
    %150 = vmatpush1.bf16.msra.mxu0 0
    %151 = vmatprep.subr.bf16.mxu0 0
    %152 = vmatpush1.bf16.msra.mxu0 0
    %153 = vmatprep.subr.bf16.mxu0 %v132
    %154 = vmatpush1.bf16.msra.mxu0 %v131
    %155 = vmatprep.subr.bf16.mxu0 %v130
    %156 = vmatpush1.bf16.msra.mxu0 %v129
    %157 = vmatprep.subr.bf16.mxu0 0
    %158 = vmatpush2.bf16.msra.mxu0 0
    %159 = vmatprep.subr.bf16.mxu0 0
    %160 = vmatpush2.bf16.msra.mxu0 0
    %161 = vmatprep.subr.bf16.mxu0 0
    %162 = vmatpush2.bf16.msra.mxu0 0
    %163 = vmatprep.subr.bf16.mxu0 0
    %164 = vmatpush2.bf16.msra.mxu0 0
    %165 = vmatprep.subr.bf16.mxu0 0
    %166 = vmatpush2.bf16.msra.mxu0 0
    %167 = vmatprep.subr.bf16.mxu0 0
    %168 = vmatpush2.bf16.msra.mxu0 0
    %169 = vmatprep.subr.bf16.mxu0 0
    %170 = vmatpush2.bf16.msra.mxu0 0
    %171 = vmatprep.subr.bf16.mxu0 0
    %172 = vmatpush2.bf16.msra.mxu0 0
    %173 = vmatprep.mubr.bf16.mxu0 0
    %174 = vmatmul.mubr.bf16.gmra.mxu0 %v139
    %v175 = vpop.f32.mrf.mxu0
    %v176 = vadd.f32 %v110, %v175
    %v177 = vpop.f32.mrf.mxu0
    %v178 = vadd.f32 %v114, %v177
    %v179 = vpop.f32.mrf.mxu0
    %v180 = vpop.f32.mrf.mxu0
    %181 = vdwg.mxu0
    %v182 = vmax.f32 %v176, 0.0
    %v183 = vmax.f32 %v178, 0.0
    %v184 = vpack.c.bf16 %v182, %v182
    %v185 = vpack.c.bf16 %v183, %v183
    %v186 = vld [vmem:[#allocation7] sm:$0xff]
    %v187 = vld [vmem:[#allocation7 + $0x8] sm:$0xff]
    %v188 = vld [vmem:[#allocation7 + $0x10] sm:$0xff]
    %v189 = vld [vmem:[#allocation7 + $0x18] sm:$0xff]
    %v190 = vld [vmem:[#allocation7 + $0x20] sm:$0xff]
    %v191 = vld [vmem:[#allocation7 + $0x28] sm:$0xff]
    %v192 = vld [vmem:[#allocation7 + $0x30] sm:$0xff]
    %v193 = vld [vmem:[#allocation7 + $0x38] sm:$0xff]
    %v194 = vld [vmem:[#allocation7 + $0x40] sm:$0xff]
    %v195 = vld [vmem:[#allocation7 + $0x48] sm:$0xff]
    %v196 = vld [vmem:[#allocation7 + $0x50] sm:$0xff]
    %v197 = vld [vmem:[#allocation7 + $0x58] sm:$0xff]
    %v198 = vld [vmem:[#allocation7 + $0x60] sm:$0xff]
    %v199 = vld [vmem:[#allocation7 + $0x68] sm:$0xff]
    %v200 = vld [vmem:[#allocation7 + $0x70] sm:$0xff]
    %v201 = vld [vmem:[#allocation7 + $0x78] sm:$0xff]
    %v202 = vld [vmem:[#allocation7 + $0x80] sm:$0xff]
    %v203 = vld [vmem:[#allocation7 + $0x88] sm:$0xff]
    %v204 = vld [vmem:[#allocation7 + $0x90] sm:$0xff]
    %v205 = vld [vmem:[#allocation7 + $0x98] sm:$0xff]
    %v206 = vld [vmem:[#allocation7 + $0xa0] sm:$0xff]
    %v207 = vld [vmem:[#allocation7 + $0xa8] sm:$0xff]
    %v208 = vld [vmem:[#allocation7 + $0xb0] sm:$0xff]
    %v209 = vld [vmem:[#allocation7 + $0xb8] sm:$0xff]
    %v210 = vld [vmem:[#allocation7 + $0xc0] sm:$0xff]
    %v211 = vld [vmem:[#allocation7 + $0xc8] sm:$0xff]
    %v212 = vld [vmem:[#allocation7 + $0xd0] sm:$0xff]
    %v213 = vld [vmem:[#allocation7 + $0xd8] sm:$0xff]
    %v214 = vld [vmem:[#allocation7 + $0xe0] sm:$0xff]
    %v215 = vld [vmem:[#allocation7 + $0xe8] sm:$0xff]
    %v216 = vld [vmem:[#allocation7 + $0xf0] sm:$0xff]
    %v217 = vld [vmem:[#allocation7 + $0xf8] sm:$0xff]
    %v218 = vld [vmem:[%s4] sm:$0x3]
    %v220 = vlaneseq
    %v221 = vshrl.u32 %v220, 7
    %v222 = vsub.s32 0, %v221
    %v223 = vrot.slane %v218, %v222
    %v224 = vlaneseq
    %v225 = vshrl.u32 %v224, 7
    %v226 = vsub.s32 1, %v225
    %v227 = vrot.slane %v218, %v226
    %v262 = vunpack.c.l.b16 %v186
    %v263 = vunpack.c.h.b16 %v186
    %v264 = vunpack.c.l.b16 %v187
    %v265 = vunpack.c.h.b16 %v187
    %v266 = vunpack.c.l.b16 %v188
    %v267 = vunpack.c.h.b16 %v188
    %v268 = vunpack.c.l.b16 %v189
    %v269 = vunpack.c.h.b16 %v189
    %v270 = vunpack.c.l.b16 %v190
    %v271 = vunpack.c.h.b16 %v190
    %v272 = vunpack.c.l.b16 %v191
    %v273 = vunpack.c.h.b16 %v191
    %v274 = vunpack.c.l.b16 %v192
    %v275 = vunpack.c.h.b16 %v192
    %v276 = vunpack.c.l.b16 %v193
    %v277 = vunpack.c.h.b16 %v193
    %v278 = vunpack.c.l.b16 %v194
    %v279 = vunpack.c.h.b16 %v194
    %v280 = vunpack.c.l.b16 %v195
    %v281 = vunpack.c.h.b16 %v195
    %v282 = vunpack.c.l.b16 %v196
    %v283 = vunpack.c.h.b16 %v196
    %v284 = vunpack.c.l.b16 %v197
    %v285 = vunpack.c.h.b16 %v197
    %v286 = vunpack.c.l.b16 %v198
    %v287 = vunpack.c.h.b16 %v198
    %v288 = vunpack.c.l.b16 %v199
    %v289 = vunpack.c.h.b16 %v199
    %v290 = vunpack.c.l.b16 %v200
    %v291 = vunpack.c.h.b16 %v200
    %v292 = vunpack.c.l.b16 %v201
    %v293 = vunpack.c.h.b16 %v201
    %v294 = vunpack.c.l.b16 %v202
    %v295 = vunpack.c.h.b16 %v202
    %v296 = vunpack.c.l.b16 %v203
    %v297 = vunpack.c.h.b16 %v203
    %v298 = vunpack.c.l.b16 %v204
    %v299 = vunpack.c.h.b16 %v204
    %v300 = vunpack.c.l.b16 %v205
    %v301 = vunpack.c.h.b16 %v205
    %v302 = vunpack.c.l.b16 %v206
    %v303 = vunpack.c.h.b16 %v206
    %v304 = vunpack.c.l.b16 %v207
    %v305 = vunpack.c.h.b16 %v207
    %v306 = vunpack.c.l.b16 %v208
    %v307 = vunpack.c.h.b16 %v208
    %v308 = vunpack.c.l.b16 %v209
    %v309 = vunpack.c.h.b16 %v209
    %v310 = vunpack.c.l.b16 %v210
    %v311 = vunpack.c.h.b16 %v210
    %v312 = vunpack.c.l.b16 %v211
    %v313 = vunpack.c.h.b16 %v211
    %v314 = vunpack.c.l.b16 %v212
    %v315 = vunpack.c.h.b16 %v212
    %v316 = vunpack.c.l.b16 %v213
    %v317 = vunpack.c.h.b16 %v213
    %v318 = vunpack.c.l.b16 %v214
    %v319 = vunpack.c.h.b16 %v214
    %v320 = vunpack.c.l.b16 %v215
    %v321 = vunpack.c.h.b16 %v215
    %v322 = vunpack.c.l.b16 %v216
    %v323 = vunpack.c.h.b16 %v216
    %v324 = vunpack.c.l.b16 %v217
    %v325 = vunpack.c.h.b16 %v217
    %v326 = vpack.c.b16 %v264, %v262
    %v327 = vpack.c.b16 %v265, %v263
    %v328 = vpack.c.b16 %v268, %v266
    %v329 = vpack.c.b16 %v269, %v267
    %v330 = vpack.c.b16 %v272, %v270
    %v331 = vpack.c.b16 %v273, %v271
    %v332 = vpack.c.b16 %v276, %v274
    %v333 = vpack.c.b16 %v277, %v275
    %v334 = vpack.c.b16 %v280, %v278
    %v335 = vpack.c.b16 %v281, %v279
    %v336 = vpack.c.b16 %v284, %v282
    %v337 = vpack.c.b16 %v285, %v283
    %v338 = vpack.c.b16 %v288, %v286
    %v339 = vpack.c.b16 %v289, %v287
    %v340 = vpack.c.b16 %v292, %v290
    %v341 = vpack.c.b16 %v293, %v291
    %v342 = vpack.c.b16 %v296, %v294
    %v343 = vpack.c.b16 %v297, %v295
    %v344 = vpack.c.b16 %v300, %v298
    %v345 = vpack.c.b16 %v301, %v299
    %v346 = vpack.c.b16 %v304, %v302
    %v347 = vpack.c.b16 %v305, %v303
    %v348 = vpack.c.b16 %v308, %v306
    %v349 = vpack.c.b16 %v309, %v307
    %v350 = vpack.c.b16 %v312, %v310
    %v351 = vpack.c.b16 %v313, %v311
    %v352 = vpack.c.b16 %v316, %v314
    %v353 = vpack.c.b16 %v317, %v315
    %v354 = vpack.c.b16 %v320, %v318
    %v355 = vpack.c.b16 %v321, %v319
    %v356 = vpack.c.b16 %v324, %v322
    %v357 = vpack.c.b16 %v325, %v323
    %390 = vmatprep.subr.bf16.mxu0 %v341
    %391 = vmatpush1.bf16.msra.mxu0 %v340
    %392 = vmatprep.subr.bf16.mxu0 %v339
    %393 = vmatpush1.bf16.msra.mxu0 %v338
    %394 = vmatprep.subr.bf16.mxu0 %v337
    %395 = vmatpush1.bf16.msra.mxu0 %v336
    %396 = vmatprep.subr.bf16.mxu0 %v335
    %397 = vmatpush1.bf16.msra.mxu0 %v334
    %398 = vmatprep.subr.bf16.mxu0 %v333
    %399 = vmatpush1.bf16.msra.mxu0 %v332
    %400 = vmatprep.subr.bf16.mxu0 %v331
    %401 = vmatpush1.bf16.msra.mxu0 %v330
    %402 = vmatprep.subr.bf16.mxu0 %v329
    %403 = vmatpush1.bf16.msra.mxu0 %v328
    %404 = vmatprep.subr.bf16.mxu0 %v327
    %405 = vmatpush1.bf16.msra.mxu0 %v326
    %406 = vmatprep.subr.bf16.mxu0 %v357
    %407 = vmatpush2.bf16.msra.mxu0 %v356
    %408 = vmatprep.subr.bf16.mxu0 %v355
    %409 = vmatpush2.bf16.msra.mxu0 %v354
    %410 = vmatprep.subr.bf16.mxu0 %v353
    %411 = vmatpush2.bf16.msra.mxu0 %v352
    %412 = vmatprep.subr.bf16.mxu0 %v351
    %413 = vmatpush2.bf16.msra.mxu0 %v350
    %414 = vmatprep.subr.bf16.mxu0 %v349
    %415 = vmatpush2.bf16.msra.mxu0 %v348
    %416 = vmatprep.subr.bf16.mxu0 %v347
    %417 = vmatpush2.bf16.msra.mxu0 %v346
    %418 = vmatprep.subr.bf16.mxu0 %v345
    %419 = vmatpush2.bf16.msra.mxu0 %v344
    %420 = vmatprep.subr.bf16.mxu0 %v343
    %421 = vmatpush2.bf16.msra.mxu0 %v342
    %422 = vmatprep.mubr.bf16.mxu0 %v185
    %423 = vmatmul.mubr.bf16.gmra.mxu0 %v184
    %v424 = vpop.f32.mrf.mxu0
    %v425 = vadd.f32 %v223, %v424
    %v426 = vpop.f32.mrf.mxu0
    %v427 = vadd.f32 %v227, %v426
    %v428 = vpop.f32.mrf.mxu0
    %v429 = vpop.f32.mrf.mxu0
    %430 = vdwg.mxu0
    %v431 = vmax.f32 %v425, 0.0
    %v432 = vmax.f32 %v427, 0.0
    %v433 = vpack.c.bf16 %v431, %v431
    %v434 = vpack.c.bf16 %v432, %v432
    %v435 = vld [vmem:[#allocation8] sm:$0xff]
    %v436 = vld [vmem:[#allocation8 + $0x8] sm:$0xff]
    %v437 = vld [vmem:[#allocation8 + $0x10] sm:$0xff]
    %v438 = vld [vmem:[#allocation8 + $0x18] sm:$0xff]
    %v439 = vld [vmem:[#allocation8 + $0x20] sm:$0xff]
    %v440 = vld [vmem:[#allocation8 + $0x28] sm:$0xff]
    %v441 = vld [vmem:[#allocation8 + $0x30] sm:$0xff]
    %v442 = vld [vmem:[#allocation8 + $0x38] sm:$0xff]
    %v443 = vld [vmem:[#allocation8 + $0x40] sm:$0xff]
    %v444 = vld [vmem:[#allocation8 + $0x48] sm:$0xff]
    %v445 = vld [vmem:[#allocation8 + $0x50] sm:$0xff]
    %v446 = vld [vmem:[#allocation8 + $0x58] sm:$0xff]
    %v447 = vld [vmem:[#allocation8 + $0x60] sm:$0xff]
    %v448 = vld [vmem:[#allocation8 + $0x68] sm:$0xff]
    %v449 = vld [vmem:[#allocation8 + $0x70] sm:$0xff]
    %v450 = vld [vmem:[#allocation8 + $0x78] sm:$0xff]
    %v451 = vld [vmem:[#allocation8 + $0x80] sm:$0xff]
    %v452 = vld [vmem:[#allocation8 + $0x88] sm:$0xff]
    %v453 = vld [vmem:[#allocation8 + $0x90] sm:$0xff]
    %v454 = vld [vmem:[#allocation8 + $0x98] sm:$0xff]
    %v455 = vld [vmem:[#allocation8 + $0xa0] sm:$0xff]
    %v456 = vld [vmem:[#allocation8 + $0xa8] sm:$0xff]
    %v457 = vld [vmem:[#allocation8 + $0xb0] sm:$0xff]
    %v458 = vld [vmem:[#allocation8 + $0xb8] sm:$0xff]
    %v459 = vld [vmem:[#allocation8 + $0xc0] sm:$0xff]
    %v460 = vld [vmem:[#allocation8 + $0xc8] sm:$0xff]
    %v461 = vld [vmem:[#allocation8 + $0xd0] sm:$0xff]
    %v462 = vld [vmem:[#allocation8 + $0xd8] sm:$0xff]
    %v463 = vld [vmem:[#allocation8 + $0xe0] sm:$0xff]
    %v464 = vld [vmem:[#allocation8 + $0xe8] sm:$0xff]
    %v465 = vld [vmem:[#allocation8 + $0xf0] sm:$0xff]
    %v466 = vld [vmem:[#allocation8 + $0xf8] sm:$0xff]
    %v467 = vld [vmem:[%s6] sm:$0x3]
    %v469 = vlaneseq
    %v470 = vshrl.u32 %v469, 7
    %v471 = vsub.s32 0, %v470
    %v472 = vrot.slane %v467, %v471
    %v473 = vlaneseq
    %v474 = vshrl.u32 %v473, 7
    %v475 = vsub.s32 1, %v474
    %v476 = vrot.slane %v467, %v475
    %v511 = vunpack.c.l.b16 %v435
    %v512 = vunpack.c.h.b16 %v435
    %v513 = vunpack.c.l.b16 %v436
    %v514 = vunpack.c.h.b16 %v436
    %v515 = vunpack.c.l.b16 %v437
    %v516 = vunpack.c.h.b16 %v437
    %v517 = vunpack.c.l.b16 %v438
    %v518 = vunpack.c.h.b16 %v438
    %v519 = vunpack.c.l.b16 %v439
    %v520 = vunpack.c.h.b16 %v439
    %v521 = vunpack.c.l.b16 %v440
    %v522 = vunpack.c.h.b16 %v440
    %v523 = vunpack.c.l.b16 %v441
    %v524 = vunpack.c.h.b16 %v441
    %v525 = vunpack.c.l.b16 %v442
    %v526 = vunpack.c.h.b16 %v442
    %v527 = vunpack.c.l.b16 %v443
    %v528 = vunpack.c.h.b16 %v443
    %v529 = vunpack.c.l.b16 %v444
    %v530 = vunpack.c.h.b16 %v444
    %v531 = vunpack.c.l.b16 %v445
    %v532 = vunpack.c.h.b16 %v445
    %v533 = vunpack.c.l.b16 %v446
    %v534 = vunpack.c.h.b16 %v446
    %v535 = vunpack.c.l.b16 %v447
    %v536 = vunpack.c.h.b16 %v447
    %v537 = vunpack.c.l.b16 %v448
    %v538 = vunpack.c.h.b16 %v448
    %v539 = vunpack.c.l.b16 %v449
    %v540 = vunpack.c.h.b16 %v449
    %v541 = vunpack.c.l.b16 %v450
    %v542 = vunpack.c.h.b16 %v450
    %v543 = vunpack.c.l.b16 %v451
    %v544 = vunpack.c.h.b16 %v451
    %v545 = vunpack.c.l.b16 %v452
    %v546 = vunpack.c.h.b16 %v452
    %v547 = vunpack.c.l.b16 %v453
    %v548 = vunpack.c.h.b16 %v453
    %v549 = vunpack.c.l.b16 %v454
    %v550 = vunpack.c.h.b16 %v454
    %v551 = vunpack.c.l.b16 %v455
    %v552 = vunpack.c.h.b16 %v455
    %v553 = vunpack.c.l.b16 %v456
    %v554 = vunpack.c.h.b16 %v456
    %v555 = vunpack.c.l.b16 %v457
    %v556 = vunpack.c.h.b16 %v457
    %v557 = vunpack.c.l.b16 %v458
    %v558 = vunpack.c.h.b16 %v458
    %v559 = vunpack.c.l.b16 %v459
    %v560 = vunpack.c.h.b16 %v459
    %v561 = vunpack.c.l.b16 %v460
    %v562 = vunpack.c.h.b16 %v460
    %v563 = vunpack.c.l.b16 %v461
    %v564 = vunpack.c.h.b16 %v461
    %v565 = vunpack.c.l.b16 %v462
    %v566 = vunpack.c.h.b16 %v462
    %v567 = vunpack.c.l.b16 %v463
    %v568 = vunpack.c.h.b16 %v463
    %v569 = vunpack.c.l.b16 %v464
    %v570 = vunpack.c.h.b16 %v464
    %v571 = vunpack.c.l.b16 %v465
    %v572 = vunpack.c.h.b16 %v465
    %v573 = vunpack.c.l.b16 %v466
    %v574 = vunpack.c.h.b16 %v466
    %v575 = vpack.c.b16 %v513, %v511
    %v576 = vpack.c.b16 %v514, %v512
    %v577 = vpack.c.b16 %v517, %v515
    %v578 = vpack.c.b16 %v518, %v516
    %v579 = vpack.c.b16 %v521, %v519
    %v580 = vpack.c.b16 %v522, %v520
    %v581 = vpack.c.b16 %v525, %v523
    %v582 = vpack.c.b16 %v526, %v524
    %v583 = vpack.c.b16 %v529, %v527
    %v584 = vpack.c.b16 %v530, %v528
    %v585 = vpack.c.b16 %v533, %v531
    %v586 = vpack.c.b16 %v534, %v532
    %v587 = vpack.c.b16 %v537, %v535
    %v588 = vpack.c.b16 %v538, %v536
    %v589 = vpack.c.b16 %v541, %v539
    %v590 = vpack.c.b16 %v542, %v540
    %v591 = vpack.c.b16 %v545, %v543
    %v592 = vpack.c.b16 %v546, %v544
    %v593 = vpack.c.b16 %v549, %v547
    %v594 = vpack.c.b16 %v550, %v548
    %v595 = vpack.c.b16 %v553, %v551
    %v596 = vpack.c.b16 %v554, %v552
    %v597 = vpack.c.b16 %v557, %v555
    %v598 = vpack.c.b16 %v558, %v556
    %v599 = vpack.c.b16 %v561, %v559
    %v600 = vpack.c.b16 %v562, %v560
    %v601 = vpack.c.b16 %v565, %v563
    %v602 = vpack.c.b16 %v566, %v564
    %v603 = vpack.c.b16 %v569, %v567
    %v604 = vpack.c.b16 %v570, %v568
    %v605 = vpack.c.b16 %v573, %v571
    %v606 = vpack.c.b16 %v574, %v572
    %639 = vmatprep.subr.bf16.mxu0 %v590
    %640 = vmatpush1.bf16.msra.mxu0 %v589
    %641 = vmatprep.subr.bf16.mxu0 %v588
    %642 = vmatpush1.bf16.msra.mxu0 %v587
    %643 = vmatprep.subr.bf16.mxu0 %v586
    %644 = vmatpush1.bf16.msra.mxu0 %v585
    %645 = vmatprep.subr.bf16.mxu0 %v584
    %646 = vmatpush1.bf16.msra.mxu0 %v583
    %647 = vmatprep.subr.bf16.mxu0 %v582
    %648 = vmatpush1.bf16.msra.mxu0 %v581
    %649 = vmatprep.subr.bf16.mxu0 %v580
    %650 = vmatpush1.bf16.msra.mxu0 %v579
    %651 = vmatprep.subr.bf16.mxu0 %v578
    %652 = vmatpush1.bf16.msra.mxu0 %v577
    %653 = vmatprep.subr.bf16.mxu0 %v576
    %654 = vmatpush1.bf16.msra.mxu0 %v575
    %655 = vmatprep.subr.bf16.mxu0 %v606
    %656 = vmatpush2.bf16.msra.mxu0 %v605
    %657 = vmatprep.subr.bf16.mxu0 %v604
    %658 = vmatpush2.bf16.msra.mxu0 %v603
    %659 = vmatprep.subr.bf16.mxu0 %v602
    %660 = vmatpush2.bf16.msra.mxu0 %v601
    %661 = vmatprep.subr.bf16.mxu0 %v600
    %662 = vmatpush2.bf16.msra.mxu0 %v599
    %663 = vmatprep.subr.bf16.mxu0 %v598
    %664 = vmatpush2.bf16.msra.mxu0 %v597
    %665 = vmatprep.subr.bf16.mxu0 %v596
    %666 = vmatpush2.bf16.msra.mxu0 %v595
    %667 = vmatprep.subr.bf16.mxu0 %v594
    %668 = vmatpush2.bf16.msra.mxu0 %v593
    %669 = vmatprep.subr.bf16.mxu0 %v592
    %670 = vmatpush2.bf16.msra.mxu0 %v591
    %671 = vmatprep.mubr.bf16.mxu0 %v434
    %672 = vmatmul.mubr.bf16.gmra.mxu0 %v433
    %v673 = vpop.f32.mrf.mxu0
    %v674 = vadd.f32 %v472, %v673
    %v675 = vpop.f32.mrf.mxu0
    %v676 = vadd.f32 %v476, %v675
    %v677 = vpop.f32.mrf.mxu0
    %v678 = vpop.f32.mrf.mxu0
    %679 = vdwg.mxu0
    %v680 = vmax.f32 %v674, 0.0
    %v681 = vmax.f32 %v676, 0.0
    %v682 = vpack.c.bf16 %v680, %v680
    %v683 = vpack.c.bf16 %v681, %v681
    %v684 = vld [vmem:[#allocation10] sm:$0xf]
    %v685 = vld [vmem:[#allocation10 + $0x4] sm:$0xf]
    %v686 = vld [vmem:[#allocation10 + $0x8] sm:$0xf]
    %v687 = vld [vmem:[#allocation10 + $0xc] sm:$0xf]
    %v688 = vld [vmem:[#allocation10 + $0x10] sm:$0xf]
    %v689 = vld [vmem:[#allocation10 + $0x14] sm:$0xf]
    %v690 = vld [vmem:[#allocation10 + $0x18] sm:$0xf]
    %v691 = vld [vmem:[#allocation10 + $0x1c] sm:$0xf]
    %v692 = vld [vmem:[#allocation10 + $0x20] sm:$0xf]
    %v693 = vld [vmem:[#allocation10 + $0x24] sm:$0xf]
    %v694 = vld [vmem:[#allocation10 + $0x28] sm:$0xf]
    %v695 = vld [vmem:[#allocation10 + $0x2c] sm:$0xf]
    %v696 = vld [vmem:[#allocation10 + $0x30] sm:$0xf]
    %v697 = vld [vmem:[#allocation10 + $0x34] sm:$0xf]
    %v698 = vld [vmem:[#allocation10 + $0x38] sm:$0xf]
    %v699 = vld [vmem:[#allocation10 + $0x3c] sm:$0xf]
    %v700 = vld [vmem:[#allocation10 + $0x40] sm:$0xf]
    %v701 = vld [vmem:[#allocation10 + $0x44] sm:$0xf]
    %v702 = vld [vmem:[#allocation10 + $0x48] sm:$0xf]
    %v703 = vld [vmem:[#allocation10 + $0x4c] sm:$0xf]
    %v704 = vld [vmem:[#allocation10 + $0x50] sm:$0xf]
    %v705 = vld [vmem:[#allocation10 + $0x54] sm:$0xf]
    %v706 = vld [vmem:[#allocation10 + $0x58] sm:$0xf]
    %v707 = vld [vmem:[#allocation10 + $0x5c] sm:$0xf]
    %v708 = vld [vmem:[#allocation10 + $0x60] sm:$0xf]
    %v709 = vld [vmem:[#allocation10 + $0x64] sm:$0xf]
    %v710 = vld [vmem:[#allocation10 + $0x68] sm:$0xf]
    %v711 = vld [vmem:[#allocation10 + $0x6c] sm:$0xf]
    %v712 = vld [vmem:[#allocation10 + $0x70] sm:$0xf]
    %v713 = vld [vmem:[#allocation10 + $0x74] sm:$0xf]
    %v714 = vld [vmem:[#allocation10 + $0x78] sm:$0xf]
    %v715 = vld [vmem:[#allocation10 + $0x7c] sm:$0xf]
    %v716 = vld [vmem:[%s8] sm:$0x1]
    %v718 = vlaneseq
    %v719 = vshrl.u32 %v718, 7
    %v720 = vsub.s32 0, %v719
    %v721 = vrot.slane %v716, %v720
    %v755 = vunpack.c.l.b16 %v684
    %v756 = vunpack.c.l.b16 %v685
    %v757 = vunpack.c.l.b16 %v686
    %v758 = vunpack.c.l.b16 %v687
    %v759 = vunpack.c.l.b16 %v688
    %v760 = vunpack.c.l.b16 %v689
    %v761 = vunpack.c.l.b16 %v690
    %v762 = vunpack.c.l.b16 %v691
    %v763 = vunpack.c.l.b16 %v692
    %v764 = vunpack.c.l.b16 %v693
    %v765 = vunpack.c.l.b16 %v694
    %v766 = vunpack.c.l.b16 %v695
    %v767 = vunpack.c.l.b16 %v696
    %v768 = vunpack.c.l.b16 %v697
    %v769 = vunpack.c.l.b16 %v698
    %v770 = vunpack.c.l.b16 %v699
    %v771 = vunpack.c.l.b16 %v700
    %v772 = vunpack.c.l.b16 %v701
    %v773 = vunpack.c.l.b16 %v702
    %v774 = vunpack.c.l.b16 %v703
    %v775 = vunpack.c.l.b16 %v704
    %v776 = vunpack.c.l.b16 %v705
    %v777 = vunpack.c.l.b16 %v706
    %v778 = vunpack.c.l.b16 %v707
    %v779 = vunpack.c.l.b16 %v708
    %v780 = vunpack.c.l.b16 %v709
    %v781 = vunpack.c.l.b16 %v710
    %v782 = vunpack.c.l.b16 %v711
    %v783 = vunpack.c.l.b16 %v712
    %v784 = vunpack.c.l.b16 %v713
    %v785 = vunpack.c.l.b16 %v714
    %v786 = vunpack.c.l.b16 %v715
    %v787 = vpack.c.b16 %v756, %v755
    %v788 = vpack.c.b16 %v758, %v757
    %v789 = vpack.c.b16 %v760, %v759
    %v790 = vpack.c.b16 %v762, %v761
    %v791 = vpack.c.b16 %v764, %v763
    %v792 = vpack.c.b16 %v766, %v765
    %v793 = vpack.c.b16 %v768, %v767
    %v794 = vpack.c.b16 %v770, %v769
    %v795 = vpack.c.b16 %v772, %v771
    %v796 = vpack.c.b16 %v774, %v773
    %v797 = vpack.c.b16 %v776, %v775
    %v798 = vpack.c.b16 %v778, %v777
    %v799 = vpack.c.b16 %v780, %v779
    %v800 = vpack.c.b16 %v782, %v781
    %v801 = vpack.c.b16 %v784, %v783
    %v802 = vpack.c.b16 %v786, %v785
    %819 = vmatprep.subr.bf16.mxu0 0
    %820 = vmatpush1.bf16.msra.mxu0 %v794
    %821 = vmatprep.subr.bf16.mxu0 0
    %822 = vmatpush1.bf16.msra.mxu0 %v793
    %823 = vmatprep.subr.bf16.mxu0 0
    %824 = vmatpush1.bf16.msra.mxu0 %v792
    %825 = vmatprep.subr.bf16.mxu0 0
    %826 = vmatpush1.bf16.msra.mxu0 %v791
    %827 = vmatprep.subr.bf16.mxu0 0
    %828 = vmatpush1.bf16.msra.mxu0 %v790
    %829 = vmatprep.subr.bf16.mxu0 0
    %830 = vmatpush1.bf16.msra.mxu0 %v789
    %831 = vmatprep.subr.bf16.mxu0 0
    %832 = vmatpush1.bf16.msra.mxu0 %v788
    %833 = vmatprep.subr.bf16.mxu0 0
    %834 = vmatpush1.bf16.msra.mxu0 %v787
    %835 = vmatprep.subr.bf16.mxu0 0
    %836 = vmatpush2.bf16.msra.mxu0 %v802
    %837 = vmatprep.subr.bf16.mxu0 0
    %838 = vmatpush2.bf16.msra.mxu0 %v801
    %839 = vmatprep.subr.bf16.mxu0 0
    %840 = vmatpush2.bf16.msra.mxu0 %v800
    %841 = vmatprep.subr.bf16.mxu0 0
    %842 = vmatpush2.bf16.msra.mxu0 %v799
    %843 = vmatprep.subr.bf16.mxu0 0
    %844 = vmatpush2.bf16.msra.mxu0 %v798
    %845 = vmatprep.subr.bf16.mxu0 0
    %846 = vmatpush2.bf16.msra.mxu0 %v797
    %847 = vmatprep.subr.bf16.mxu0 0
    %848 = vmatpush2.bf16.msra.mxu0 %v796
    %849 = vmatprep.subr.bf16.mxu0 0
    %850 = vmatpush2.bf16.msra.mxu0 %v795
    %851 = vmatprep.mubr.bf16.mxu0 %v683
    %852 = vmatmul.mubr.bf16.gmra.mxu0 %v682
    %v853 = vpop.f32.mrf.mxu0
    %v854 = vadd.f32 %v721, %v853
    %v855 = vpop.f32.mrf.mxu0
    %v856 = vpop.f32.mrf.mxu0
    %v857 = vpop.f32.mrf.mxu0
    %858 = vdwg.mxu0
    %v859 = vtanh.pop %v854
    %860 = vst [vmem:[#allocation11] sm:$0xff] %v859
    // Predicated region
    $region58: #{tpu_custom_call.1} parent=1 // pred_check
      _
    $region59: #{tpu_custom_call.1} parent=1 // pred_check_branch
      %862 = sbr.rel (0) target = $region61
    $region60: #{tpu_custom_call.1} parent=1 // pred_region
      %s864 = ssub.s32 128, 128
      %865 = vsyncadd [#allocation4], %s864
      %s867 = sshll.u32 [#allocation11], 4
      %s868 = int_to_ptr.vmem [resolvable:$true] %s867
      %870 = dma.vmem_to_hbm [thread:$0]  %s868, 128, %s9, [#allocation4]
    $region61: #{tpu_custom_call.1} parent=1 // pred_fallthru
      _
    // Predicated region
    $region62: #{tpu_custom_call.1} parent=1 // pred_check
      _
    $region63: #{tpu_custom_call.1} parent=1 // pred_check_branch
      %872 = sbr.rel (0) target = $region65
    $region64: #{tpu_custom_call.1} parent=1 // pred_region
      %873 = dma.done [#allocation4], 128
    $region65: #{tpu_custom_call.1} parent=1 // pred_fallthru
      _
    %874 = vsyncpa [#allocation3], 1
    %875 = vsyncpa [#allocation6], 1
    %876 = vsyncpa [#allocation9], 1
    %877 = vsyncpa [#allocation4], 1

</llo_original>
